<compile_context>
chip_gen: v6e
topology: v6e:2x2x1
jax: 0.10.0
libtpu: 0.0.40
codegen_flags: <defaults>
</compile_context>

<pallas_src>
import jax
import jax.numpy as jnp
from jax.experimental import pallas as pl
from jax.experimental.pallas import tpu as pltpu

BATCH = 2
C, H, W = 4, 16, 16
D_IN = C * H * W   # 1024
D_HID = 64
D_EMB = 32


def _siamese_kernel(x_ref, w1_ref, w2_ref, b_ref, o_ref):
    # x_ref : (2B, D_IN) f32   -- rows [:B] = branch 1 (x1), rows [B:] = branch 2 (x2)
    # w1_ref: (D_IN, D_HID) bf16      (shared parameters)
    # w2_ref: (D_HID, D_EMB) bf16     (shared parameters)
    # b_ref : (1, D_HID + D_EMB) f32  -- packed [b1 | b2]
    # o_ref : (2B, D_EMB) f32
    b = b_ref[...]  # one vreg after lane padding; sliced below

    # Layer 1: one fused matmul over both branches (M = 2B).  bf16 MXU with
    # f32 accumulation; bias/ReLU in f32 on the VPU.
    h = jnp.dot(x_ref[...].astype(jnp.bfloat16), w1_ref[...],
                preferred_element_type=jnp.float32)
    h = jnp.maximum(h + b[:, :D_HID], 0.0)  # ReLU

    # Layer 2: second fused matmul.
    e = jnp.dot(h.astype(jnp.bfloat16), w2_ref[...],
                preferred_element_type=jnp.float32) + b[:, D_HID:]

    o_ref[...] = e.astype(o_ref.dtype)


def siamese_forward(x1, x2, params):
    """Pallas SiameseNet forward: returns (embedding(x1), embedding(x2))."""
    w1, b1, w2, b2 = params
    B = x1.shape[0]

    # PyTorch-style flatten of NCHW -> (B, C*H*W), then stack both branches
    # into a single M = 2B operand so each layer is one matmul.
    xs = jnp.concatenate([x1.reshape(B, -1), x2.reshape(B, -1)], axis=0)
    # Pack the two bias vectors into one operand (fewer DMA descriptors).
    b_packed = jnp.concatenate([b1, b2], axis=1)  # (1, D_HID + D_EMB)

    vmem = lambda: pl.BlockSpec(memory_space=pltpu.MemorySpace.VMEM)

    flops = 2 * (2 * B) * D_IN * D_HID + 2 * (2 * B) * D_HID * D_EMB
    bytes_accessed = (xs.size * 4 + w1.size * 2 + w2.size * 2
                      + b_packed.size * 4 + (2 * B) * D_EMB * 4)

    out = pl.pallas_call(
        _siamese_kernel,
        out_shape=jax.ShapeDtypeStruct((2 * B, D_EMB), jnp.float32),
        # Single kernel step (no grid): total working set ~0.4 MiB with lane
        # padding, comfortably inside VMEM on v5e/v6e and v7x (64 MiB).
        in_specs=[vmem() for _ in range(4)],
        out_specs=vmem(),
        cost_estimate=pl.CostEstimate(flops=flops, transcendentals=0,
                                      bytes_accessed=bytes_accessed),
    )(xs, w1, w2, b_packed)

    # Split preserves SiameseNet pair ordering: rows [:B] came from x1.
    return out[:B], out[B:]


def _reference_embedding(x, params):
    """Pure-JAX reference mirroring the kernel's bf16 weight/input casts."""
    w1, b1, w2, b2 = params
    xf = x.reshape(x.shape[0], -1).astype(jnp.bfloat16)
    h = jnp.dot(xf, w1, preferred_element_type=jnp.float32) + b1
    h = jnp.maximum(h, 0.0)
    e = jnp.dot(h.astype(jnp.bfloat16), w2,
                preferred_element_type=jnp.float32) + b2
    return e


if __name__ == "__main__":
    key = jax.random.PRNGKey(0)
    kx1, kx2, kw1, kw2, kb1, kb2 = jax.random.split(key, 6)

    # Deterministic example inputs (NCHW, like PyTorch).
    x1 = jax.random.normal(kx1, (BATCH, C, H, W), dtype=jnp.float32)
    x2 = jax.random.normal(kx2, (BATCH, C, H, W), dtype=jnp.float32)

    # Deterministic synthetic parameters (shared across both branches).
    # Weights in bf16 (halves the dominant HBM weight traffic, feeds the MXU
    # natively); biases stay f32.
    w1 = (jax.random.normal(kw1, (D_IN, D_HID), dtype=jnp.float32) * 0.02
          ).astype(jnp.bfloat16)
    b1 = jax.random.normal(kb1, (1, D_HID), dtype=jnp.float32) * 0.01
    w2 = (jax.random.normal(kw2, (D_HID, D_EMB), dtype=jnp.float32) * 0.02
          ).astype(jnp.bfloat16)
    b2 = jax.random.normal(kb2, (1, D_EMB), dtype=jnp.float32) * 0.01
    params = (w1, b1, w2, b2)

    out1, out2 = siamese_forward(x1, x2, params)
    jax.block_until_ready((out1, out2))

    # Correctness check against a pure-JAX reference of the same embedding net
    # (tolerance relaxed for the in-kernel bf16 casts).
    ref1 = _reference_embedding(x1, params)
    ref2 = _reference_embedding(x2, params)
    assert out1.shape == (BATCH, D_EMB) and out2.shape == (BATCH, D_EMB)
    assert jnp.allclose(out1, ref1, atol=1e-2, rtol=1e-2)
    assert jnp.allclose(out2, ref2, atol=1e-2, rtol=1e-2)

    print("KERNEL_OK")
</pallas_src>

<mosaic_0001>
module attributes {stable_mosaic.version = 11 : i64} {
  func.func @_siamese_kernel(%arg0: memref<4x1024xf32, #tpu.memory_space<vmem>>, %arg1: memref<1024x64xbf16, #tpu.memory_space<vmem>>, %arg2: memref<64x32xbf16, #tpu.memory_space<vmem>>, %arg3: memref<1x96xf32, #tpu.memory_space<vmem>>, %arg4: memref<4x32xf32, #tpu.memory_space<vmem>>) attributes {dimension_semantics = [], scalar_prefetch = 0 : i64, scratch_operands = 0 : i64, tpu.core_type = #tpu.core_type<tc>} {
    %c0 = arith.constant 0 : index
    %c0_0 = arith.constant 0 : index
    %0 = vector.load %arg3[%c0, %c0_0] : memref<1x96xf32, #tpu.memory_space<vmem>>, vector<1x96xf32>
    %c0_1 = arith.constant 0 : index
    %c0_2 = arith.constant 0 : index
    %1 = vector.load %arg0[%c0_1, %c0_2] : memref<4x1024xf32, #tpu.memory_space<vmem>>, vector<4x1024xf32>
    %2 = arith.truncf %1 : vector<4x1024xf32> to vector<4x1024xbf16>
    %c0_3 = arith.constant 0 : index
    %c0_4 = arith.constant 0 : index
    %3 = vector.load %arg1[%c0_3, %c0_4] : memref<1024x64xbf16, #tpu.memory_space<vmem>>, vector<1024x64xbf16>
    %cst = arith.constant dense<0.000000e+00> : vector<4x64xf32>
    %4 = tpu.matmul %2, %3, %cst {dimension_numbers = #tpu.dot_dimension_numbers<[1], [0], [0], [1], [0, 0, 1, 1], [], []>} : vector<4x1024xbf16>, vector<1024x64xbf16>, vector<4x64xf32> -> vector<4x64xf32>
    %5 = vector.extract_strided_slice %0 {offsets = [0, 0], sizes = [1, 64], strides = [1, 1]} : vector<1x96xf32> to vector<1x64xf32>
    %6 = vector.broadcast %5 : vector<1x64xf32> to vector<4x64xf32>
    %7 = arith.addf %4, %6 : vector<4x64xf32>
    %cst_5 = arith.constant 0.000000e+00 : f32
    %8 = vector.broadcast %cst_5 : f32 to vector<4x64xf32>
    %9 = arith.maximumf %7, %8 : vector<4x64xf32>
    %10 = arith.truncf %9 : vector<4x64xf32> to vector<4x64xbf16>
    %c0_6 = arith.constant 0 : index
    %c0_7 = arith.constant 0 : index
    %11 = vector.load %arg2[%c0_6, %c0_7] : memref<64x32xbf16, #tpu.memory_space<vmem>>, vector<64x32xbf16>
    %cst_8 = arith.constant dense<0.000000e+00> : vector<4x32xf32>
    %12 = tpu.matmul %10, %11, %cst_8 {dimension_numbers = #tpu.dot_dimension_numbers<[1], [0], [0], [1], [0, 0, 1, 1], [], []>} : vector<4x64xbf16>, vector<64x32xbf16>, vector<4x32xf32> -> vector<4x32xf32>
    %13 = vector.extract_strided_slice %0 {offsets = [0, 64], sizes = [1, 32], strides = [1, 1]} : vector<1x96xf32> to vector<1x32xf32>
    %14 = vector.broadcast %13 : vector<1x32xf32> to vector<4x32xf32>
    %15 = arith.addf %12, %14 : vector<4x32xf32>
    %c0_9 = arith.constant 0 : index
    %c0_10 = arith.constant 0 : index
    %16 = vector.load %arg4[%c0_9, %c0_10] : memref<4x32xf32, #tpu.memory_space<vmem>>, vector<4x32xf32>
    tpu.vector_store %arg4[%c0_9, %c0_10], %15 {strides = array<i32>} : memref<4x32xf32, #tpu.memory_space<vmem>>, vector<4x32xf32>,
    return
  }
}

</mosaic_0001>

<llo_original>
// kernel: tpu_custom_call.1
$region0: #{tpu_custom_call.1}
  #allocation0 [shape = 'u32[]', space=smem, size = 0x4, offset = 0x4, fixed_abs, tag = 'smem constant byte address 0x4 - core index']
  #allocation1 [shape = 'u32[144,128]{1,0:T(1,128)}', space=vmem, size = 0x12000, scoped, tag = 'internal scratch']
  %s0 = inlined_call_operand.vmem [shape: f32[4,1024], index: 0, kind: input, shape index: {}]
  %s1 = inlined_call_operand.vmem [shape: bf16[1024,64], index: 1, kind: input, shape index: {}]
  %s2 = inlined_call_operand.vmem [shape: bf16[64,32], index: 2, kind: input, shape index: {}]
  %s3 = inlined_call_operand.vmem [shape: f32[1,96], index: 3, kind: input, shape index: {}]
  %s4 = inlined_call_operand.hbm [shape: f32[4,32], index: 4, kind: output, shape index: {}]
  %s5 = sld [smem:[#allocation0]]
  $region26: #{tpu_custom_call.1} parent=0
    _
  %s7 = ssub.s32 1, %s5
  %s8 = scalar_select 0, %s7, %s5
  $region1: #{tpu_custom_call.1} parent=0
    #allocation2 [shape = 'u8[2048]{0}', space=vmem, size = 0x800, scoped, tag = 'output window, operand 0, single buffered']
    #allocation3 [shape = 's32[1]{0}', space=sflag, size = 0x4, scoped, tag = 'scoped memory for tpu_custom_call.1']
    %9 = vsyncpa [#allocation3], 0
    // Predicated region
    $region2: #{tpu_custom_call.1} parent=1 // pred_check
      _
    $region3: #{tpu_custom_call.1} parent=1 // pred_check_branch
      %11 = sbr.rel (0) target = $region5
    $region4: #{tpu_custom_call.1} parent=1 // pred_region
      _
    $region5: #{tpu_custom_call.1} parent=1 // pred_fallthru
      _
    // Predicated region
    $region6: #{tpu_custom_call.1} parent=1 // pred_check
      _
    $region7: #{tpu_custom_call.1} parent=1 // pred_check_branch
      %13 = sbr.rel (0) target = $region9
    $region8: #{tpu_custom_call.1} parent=1 // pred_region
      _
    $region9: #{tpu_custom_call.1} parent=1 // pred_fallthru
      _
    // Predicated region
    $region10: #{tpu_custom_call.1} parent=1 // pred_check
      _
    $region11: #{tpu_custom_call.1} parent=1 // pred_check_branch
      %15 = sbr.rel (0) target = $region13
    $region12: #{tpu_custom_call.1} parent=1 // pred_region
      _
    $region13: #{tpu_custom_call.1} parent=1 // pred_fallthru
      _
    // Predicated region
    $region14: #{tpu_custom_call.1} parent=1 // pred_check
      _
    $region15: #{tpu_custom_call.1} parent=1 // pred_check_branch
      %17 = sbr.rel (0) target = $region17
    $region16: #{tpu_custom_call.1} parent=1 // pred_region
      _
    $region17: #{tpu_custom_call.1} parent=1 // pred_fallthru
      _
    %v19 = vld [vmem:[%s3] sm:$0x1]
    %v20 = vld [vmem:[%s0] sm:$0xff]
    %v21 = vld [vmem:[%s0 + $0x8] sm:$0xff]
    %v22 = vld [vmem:[%s0 + $0x10] sm:$0xff]
    %v23 = vld [vmem:[%s0 + $0x18] sm:$0xff]
    %v28 = vcombine.high %v20, %v20
    %v29 = vcombine.high %v21, %v21
    %v30 = vcombine.high %v22, %v22
    %v31 = vcombine.high %v23, %v23
    %v36 = vpack.c.bf16 %v20, %v20
    %v37 = vpack.c.bf16 %v28, %v28
    %v38 = vpack.c.bf16 %v21, %v21
    %v39 = vpack.c.bf16 %v29, %v29
    %v40 = vpack.c.bf16 %v22, %v22
    %v41 = vpack.c.bf16 %v30, %v30
    %v42 = vpack.c.bf16 %v23, %v23
    %v43 = vpack.c.bf16 %v31, %v31
    %v44 = vld [vmem:[%s1] sm:$0xf]
    %v45 = vld [vmem:[%s1 + $0x4] sm:$0xf]
    %v46 = vld [vmem:[%s1 + $0x8] sm:$0xf]
    %v47 = vld [vmem:[%s1 + $0xc] sm:$0xf]
    %v48 = vld [vmem:[%s1 + $0x10] sm:$0xf]
    %v49 = vld [vmem:[%s1 + $0x14] sm:$0xf]
    %v50 = vld [vmem:[%s1 + $0x18] sm:$0xf]
    %v51 = vld [vmem:[%s1 + $0x1c] sm:$0xf]
    %v52 = vld [vmem:[%s1 + $0x20] sm:$0xf]
    %v53 = vld [vmem:[%s1 + $0x24] sm:$0xf]
    %v54 = vld [vmem:[%s1 + $0x28] sm:$0xf]
    %v55 = vld [vmem:[%s1 + $0x2c] sm:$0xf]
    %v56 = vld [vmem:[%s1 + $0x30] sm:$0xf]
    %v57 = vld [vmem:[%s1 + $0x34] sm:$0xf]
    %v58 = vld [vmem:[%s1 + $0x38] sm:$0xf]
    %v59 = vld [vmem:[%s1 + $0x3c] sm:$0xf]
    %v60 = vld [vmem:[%s1 + $0x40] sm:$0xf]
    %v61 = vld [vmem:[%s1 + $0x44] sm:$0xf]
    %v62 = vld [vmem:[%s1 + $0x48] sm:$0xf]
    %v63 = vld [vmem:[%s1 + $0x4c] sm:$0xf]
    %v64 = vld [vmem:[%s1 + $0x50] sm:$0xf]
    %v65 = vld [vmem:[%s1 + $0x54] sm:$0xf]
    %v66 = vld [vmem:[%s1 + $0x58] sm:$0xf]
    %v67 = vld [vmem:[%s1 + $0x5c] sm:$0xf]
    %v68 = vld [vmem:[%s1 + $0x60] sm:$0xf]
    %v69 = vld [vmem:[%s1 + $0x64] sm:$0xf]
    %v70 = vld [vmem:[%s1 + $0x68] sm:$0xf]
    %v71 = vld [vmem:[%s1 + $0x6c] sm:$0xf]
    %v72 = vld [vmem:[%s1 + $0x70] sm:$0xf]
    %v73 = vld [vmem:[%s1 + $0x74] sm:$0xf]
    %v74 = vld [vmem:[%s1 + $0x78] sm:$0xf]
    %v75 = vld [vmem:[%s1 + $0x7c] sm:$0xf]
    %v76 = vld [vmem:[%s1 + $0x80] sm:$0xf]
    %v77 = vld [vmem:[%s1 + $0x84] sm:$0xf]
    %v78 = vld [vmem:[%s1 + $0x88] sm:$0xf]
    %v79 = vld [vmem:[%s1 + $0x8c] sm:$0xf]
    %v80 = vld [vmem:[%s1 + $0x90] sm:$0xf]
    %v81 = vld [vmem:[%s1 + $0x94] sm:$0xf]
    %v82 = vld [vmem:[%s1 + $0x98] sm:$0xf]
    %v83 = vld [vmem:[%s1 + $0x9c] sm:$0xf]
    %v84 = vld [vmem:[%s1 + $0xa0] sm:$0xf]
    %v85 = vld [vmem:[%s1 + $0xa4] sm:$0xf]
    %v86 = vld [vmem:[%s1 + $0xa8] sm:$0xf]
    %v87 = vld [vmem:[%s1 + $0xac] sm:$0xf]
    %v88 = vld [vmem:[%s1 + $0xb0] sm:$0xf]
    %v89 = vld [vmem:[%s1 + $0xb4] sm:$0xf]
    %v90 = vld [vmem:[%s1 + $0xb8] sm:$0xf]
    %v91 = vld [vmem:[%s1 + $0xbc] sm:$0xf]
    %v92 = vld [vmem:[%s1 + $0xc0] sm:$0xf]
    %v93 = vld [vmem:[%s1 + $0xc4] sm:$0xf]
    %v94 = vld [vmem:[%s1 + $0xc8] sm:$0xf]
    %v95 = vld [vmem:[%s1 + $0xcc] sm:$0xf]
    %v96 = vld [vmem:[%s1 + $0xd0] sm:$0xf]
    %v97 = vld [vmem:[%s1 + $0xd4] sm:$0xf]
    %v98 = vld [vmem:[%s1 + $0xd8] sm:$0xf]
    %v99 = vld [vmem:[%s1 + $0xdc] sm:$0xf]
    %v100 = vld [vmem:[%s1 + $0xe0] sm:$0xf]
    %v101 = vld [vmem:[%s1 + $0xe4] sm:$0xf]
    %v102 = vld [vmem:[%s1 + $0xe8] sm:$0xf]
    %v103 = vld [vmem:[%s1 + $0xec] sm:$0xf]
    %v104 = vld [vmem:[%s1 + $0xf0] sm:$0xf]
    %v105 = vld [vmem:[%s1 + $0xf4] sm:$0xf]
    %v106 = vld [vmem:[%s1 + $0xf8] sm:$0xf]
    %v107 = vld [vmem:[%s1 + $0xfc] sm:$0xf]
    %v108 = vld [vmem:[%s1 + $0x100] sm:$0xf]
    %v109 = vld [vmem:[%s1 + $0x104] sm:$0xf]
    %v110 = vld [vmem:[%s1 + $0x108] sm:$0xf]
    %v111 = vld [vmem:[%s1 + $0x10c] sm:$0xf]
    %v112 = vld [vmem:[%s1 + $0x110] sm:$0xf]
    %v113 = vld [vmem:[%s1 + $0x114] sm:$0xf]
    %v114 = vld [vmem:[%s1 + $0x118] sm:$0xf]
    %v115 = vld [vmem:[%s1 + $0x11c] sm:$0xf]
    %v116 = vld [vmem:[%s1 + $0x120] sm:$0xf]
    %v117 = vld [vmem:[%s1 + $0x124] sm:$0xf]
    %v118 = vld [vmem:[%s1 + $0x128] sm:$0xf]
    %v119 = vld [vmem:[%s1 + $0x12c] sm:$0xf]
    %v120 = vld [vmem:[%s1 + $0x130] sm:$0xf]
    %v121 = vld [vmem:[%s1 + $0x134] sm:$0xf]
    %v122 = vld [vmem:[%s1 + $0x138] sm:$0xf]
    %v123 = vld [vmem:[%s1 + $0x13c] sm:$0xf]
    %v124 = vld [vmem:[%s1 + $0x140] sm:$0xf]
    %v125 = vld [vmem:[%s1 + $0x144] sm:$0xf]
    %v126 = vld [vmem:[%s1 + $0x148] sm:$0xf]
    %v127 = vld [vmem:[%s1 + $0x14c] sm:$0xf]
    %v128 = vld [vmem:[%s1 + $0x150] sm:$0xf]
    %v129 = vld [vmem:[%s1 + $0x154] sm:$0xf]
    %v130 = vld [vmem:[%s1 + $0x158] sm:$0xf]
    %v131 = vld [vmem:[%s1 + $0x15c] sm:$0xf]
    %v132 = vld [vmem:[%s1 + $0x160] sm:$0xf]
    %v133 = vld [vmem:[%s1 + $0x164] sm:$0xf]
    %v134 = vld [vmem:[%s1 + $0x168] sm:$0xf]
    %v135 = vld [vmem:[%s1 + $0x16c] sm:$0xf]
    %v136 = vld [vmem:[%s1 + $0x170] sm:$0xf]
    %v137 = vld [vmem:[%s1 + $0x174] sm:$0xf]
    %v138 = vld [vmem:[%s1 + $0x178] sm:$0xf]
    %v139 = vld [vmem:[%s1 + $0x17c] sm:$0xf]
    %v140 = vld [vmem:[%s1 + $0x180] sm:$0xf]
    %v141 = vld [vmem:[%s1 + $0x184] sm:$0xf]
    %v142 = vld [vmem:[%s1 + $0x188] sm:$0xf]
    %v143 = vld [vmem:[%s1 + $0x18c] sm:$0xf]
    %v144 = vld [vmem:[%s1 + $0x190] sm:$0xf]
    %v145 = vld [vmem:[%s1 + $0x194] sm:$0xf]
    %v146 = vld [vmem:[%s1 + $0x198] sm:$0xf]
    %v147 = vld [vmem:[%s1 + $0x19c] sm:$0xf]
    %v148 = vld [vmem:[%s1 + $0x1a0] sm:$0xf]
    %v149 = vld [vmem:[%s1 + $0x1a4] sm:$0xf]
    %v150 = vld [vmem:[%s1 + $0x1a8] sm:$0xf]
    %v151 = vld [vmem:[%s1 + $0x1ac] sm:$0xf]
    %v152 = vld [vmem:[%s1 + $0x1b0] sm:$0xf]
    %v153 = vld [vmem:[%s1 + $0x1b4] sm:$0xf]
    %v154 = vld [vmem:[%s1 + $0x1b8] sm:$0xf]
    %v155 = vld [vmem:[%s1 + $0x1bc] sm:$0xf]
    %v156 = vld [vmem:[%s1 + $0x1c0] sm:$0xf]
    %v157 = vld [vmem:[%s1 + $0x1c4] sm:$0xf]
    %v158 = vld [vmem:[%s1 + $0x1c8] sm:$0xf]
    %v159 = vld [vmem:[%s1 + $0x1cc] sm:$0xf]
    %v160 = vld [vmem:[%s1 + $0x1d0] sm:$0xf]
    %v161 = vld [vmem:[%s1 + $0x1d4] sm:$0xf]
    %v162 = vld [vmem:[%s1 + $0x1d8] sm:$0xf]
    %v163 = vld [vmem:[%s1 + $0x1dc] sm:$0xf]
    %v164 = vld [vmem:[%s1 + $0x1e0] sm:$0xf]
    %v165 = vld [vmem:[%s1 + $0x1e4] sm:$0xf]
    %v166 = vld [vmem:[%s1 + $0x1e8] sm:$0xf]
    %v167 = vld [vmem:[%s1 + $0x1ec] sm:$0xf]
    %v168 = vld [vmem:[%s1 + $0x1f0] sm:$0xf]
    %v169 = vld [vmem:[%s1 + $0x1f4] sm:$0xf]
    %v170 = vld [vmem:[%s1 + $0x1f8] sm:$0xf]
    %v171 = vld [vmem:[%s1 + $0x1fc] sm:$0xf]
    %v173 = vlaneseq
    %v174 = vshrl.u32 %v173, 7
    %v175 = vsub.s32 0, %v174
    %v176 = vrot.slane %v19, %v175
    %v306 = vunpack.c.l.b16 %v44
    %v307 = vunpack.c.l.b16 %v45
    %v308 = vunpack.c.l.b16 %v46
    %v309 = vunpack.c.l.b16 %v47
    %v310 = vunpack.c.l.b16 %v48
    %v311 = vunpack.c.l.b16 %v49
    %v312 = vunpack.c.l.b16 %v50
    %v313 = vunpack.c.l.b16 %v51
    %v314 = vunpack.c.l.b16 %v52
    %v315 = vunpack.c.l.b16 %v53
    %v316 = vunpack.c.l.b16 %v54
    %v317 = vunpack.c.l.b16 %v55
    %v318 = vunpack.c.l.b16 %v56
    %v319 = vunpack.c.l.b16 %v57
    %v320 = vunpack.c.l.b16 %v58
    %v321 = vunpack.c.l.b16 %v59
    %v322 = vunpack.c.l.b16 %v60
    %v323 = vunpack.c.l.b16 %v61
    %v324 = vunpack.c.l.b16 %v62
    %v325 = vunpack.c.l.b16 %v63
    %v326 = vunpack.c.l.b16 %v64
    %v327 = vunpack.c.l.b16 %v65
    %v328 = vunpack.c.l.b16 %v66
    %v329 = vunpack.c.l.b16 %v67
    %v330 = vunpack.c.l.b16 %v68
    %v331 = vunpack.c.l.b16 %v69
    %v332 = vunpack.c.l.b16 %v70
    %v333 = vunpack.c.l.b16 %v71
    %v334 = vunpack.c.l.b16 %v72
    %v335 = vunpack.c.l.b16 %v73
    %v336 = vunpack.c.l.b16 %v74
    %v337 = vunpack.c.l.b16 %v75
    %v338 = vunpack.c.l.b16 %v76
    %v339 = vunpack.c.l.b16 %v77
    %v340 = vunpack.c.l.b16 %v78
    %v341 = vunpack.c.l.b16 %v79
    %v342 = vunpack.c.l.b16 %v80
    %v343 = vunpack.c.l.b16 %v81
    %v344 = vunpack.c.l.b16 %v82
    %v345 = vunpack.c.l.b16 %v83
    %v346 = vunpack.c.l.b16 %v84
    %v347 = vunpack.c.l.b16 %v85
    %v348 = vunpack.c.l.b16 %v86
    %v349 = vunpack.c.l.b16 %v87
    %v350 = vunpack.c.l.b16 %v88
    %v351 = vunpack.c.l.b16 %v89
    %v352 = vunpack.c.l.b16 %v90
    %v353 = vunpack.c.l.b16 %v91
    %v354 = vunpack.c.l.b16 %v92
    %v355 = vunpack.c.l.b16 %v93
    %v356 = vunpack.c.l.b16 %v94
    %v357 = vunpack.c.l.b16 %v95
    %v358 = vunpack.c.l.b16 %v96
    %v359 = vunpack.c.l.b16 %v97
    %v360 = vunpack.c.l.b16 %v98
    %v361 = vunpack.c.l.b16 %v99
    %v362 = vunpack.c.l.b16 %v100
    %v363 = vunpack.c.l.b16 %v101
    %v364 = vunpack.c.l.b16 %v102
    %v365 = vunpack.c.l.b16 %v103
    %v366 = vunpack.c.l.b16 %v104
    %v367 = vunpack.c.l.b16 %v105
    %v368 = vunpack.c.l.b16 %v106
    %v369 = vunpack.c.l.b16 %v107
    %v370 = vunpack.c.l.b16 %v108
    %v371 = vunpack.c.l.b16 %v109
    %v372 = vunpack.c.l.b16 %v110
    %v373 = vunpack.c.l.b16 %v111
    %v374 = vunpack.c.l.b16 %v112
    %v375 = vunpack.c.l.b16 %v113
    %v376 = vunpack.c.l.b16 %v114
    %v377 = vunpack.c.l.b16 %v115
    %v378 = vunpack.c.l.b16 %v116
    %v379 = vunpack.c.l.b16 %v117
    %v380 = vunpack.c.l.b16 %v118
    %v381 = vunpack.c.l.b16 %v119
    %v382 = vunpack.c.l.b16 %v120
    %v383 = vunpack.c.l.b16 %v121
    %v384 = vunpack.c.l.b16 %v122
    %v385 = vunpack.c.l.b16 %v123
    %v386 = vunpack.c.l.b16 %v124
    %v387 = vunpack.c.l.b16 %v125
    %v388 = vunpack.c.l.b16 %v126
    %v389 = vunpack.c.l.b16 %v127
    %v390 = vunpack.c.l.b16 %v128
    %v391 = vunpack.c.l.b16 %v129
    %v392 = vunpack.c.l.b16 %v130
    %v393 = vunpack.c.l.b16 %v131
    %v394 = vunpack.c.l.b16 %v132
    %v395 = vunpack.c.l.b16 %v133
    %v396 = vunpack.c.l.b16 %v134
    %v397 = vunpack.c.l.b16 %v135
    %v398 = vunpack.c.l.b16 %v136
    %v399 = vunpack.c.l.b16 %v137
    %v400 = vunpack.c.l.b16 %v138
    %v401 = vunpack.c.l.b16 %v139
    %v402 = vunpack.c.l.b16 %v140
    %v403 = vunpack.c.l.b16 %v141
    %v404 = vunpack.c.l.b16 %v142
    %v405 = vunpack.c.l.b16 %v143
    %v406 = vunpack.c.l.b16 %v144
    %v407 = vunpack.c.l.b16 %v145
    %v408 = vunpack.c.l.b16 %v146
    %v409 = vunpack.c.l.b16 %v147
    %v410 = vunpack.c.l.b16 %v148
    %v411 = vunpack.c.l.b16 %v149
    %v412 = vunpack.c.l.b16 %v150
    %v413 = vunpack.c.l.b16 %v151
    %v414 = vunpack.c.l.b16 %v152
    %v415 = vunpack.c.l.b16 %v153
    %v416 = vunpack.c.l.b16 %v154
    %v417 = vunpack.c.l.b16 %v155
    %v418 = vunpack.c.l.b16 %v156
    %v419 = vunpack.c.l.b16 %v157
    %v420 = vunpack.c.l.b16 %v158
    %v421 = vunpack.c.l.b16 %v159
    %v422 = vunpack.c.l.b16 %v160
    %v423 = vunpack.c.l.b16 %v161
    %v424 = vunpack.c.l.b16 %v162
    %v425 = vunpack.c.l.b16 %v163
    %v426 = vunpack.c.l.b16 %v164
    %v427 = vunpack.c.l.b16 %v165
    %v428 = vunpack.c.l.b16 %v166
    %v429 = vunpack.c.l.b16 %v167
    %v430 = vunpack.c.l.b16 %v168
    %v431 = vunpack.c.l.b16 %v169
    %v432 = vunpack.c.l.b16 %v170
    %v433 = vunpack.c.l.b16 %v171
    %v434 = vpack.c.b16 %v307, %v306
    %v435 = vpack.c.b16 %v309, %v308
    %v436 = vpack.c.b16 %v311, %v310
    %v437 = vpack.c.b16 %v313, %v312
    %v438 = vpack.c.b16 %v315, %v314
    %v439 = vpack.c.b16 %v317, %v316
    %v440 = vpack.c.b16 %v319, %v318
    %v441 = vpack.c.b16 %v321, %v320
    %v442 = vpack.c.b16 %v323, %v322
    %v443 = vpack.c.b16 %v325, %v324
    %v444 = vpack.c.b16 %v327, %v326
    %v445 = vpack.c.b16 %v329, %v328
    %v446 = vpack.c.b16 %v331, %v330
    %v447 = vpack.c.b16 %v333, %v332
    %v448 = vpack.c.b16 %v335, %v334
    %v449 = vpack.c.b16 %v337, %v336
    %v450 = vpack.c.b16 %v339, %v338
    %v451 = vpack.c.b16 %v341, %v340
    %v452 = vpack.c.b16 %v343, %v342
    %v453 = vpack.c.b16 %v345, %v344
    %v454 = vpack.c.b16 %v347, %v346
    %v455 = vpack.c.b16 %v349, %v348
    %v456 = vpack.c.b16 %v351, %v350
    %v457 = vpack.c.b16 %v353, %v352
    %v458 = vpack.c.b16 %v355, %v354
    %v459 = vpack.c.b16 %v357, %v356
    %v460 = vpack.c.b16 %v359, %v358
    %v461 = vpack.c.b16 %v361, %v360
    %v462 = vpack.c.b16 %v363, %v362
    %v463 = vpack.c.b16 %v365, %v364
    %v464 = vpack.c.b16 %v367, %v366
    %v465 = vpack.c.b16 %v369, %v368
    %v466 = vpack.c.b16 %v371, %v370
    %v467 = vpack.c.b16 %v373, %v372
    %v468 = vpack.c.b16 %v375, %v374
    %v469 = vpack.c.b16 %v377, %v376
    %v470 = vpack.c.b16 %v379, %v378
    %v471 = vpack.c.b16 %v381, %v380
    %v472 = vpack.c.b16 %v383, %v382
    %v473 = vpack.c.b16 %v385, %v384
    %v474 = vpack.c.b16 %v387, %v386
    %v475 = vpack.c.b16 %v389, %v388
    %v476 = vpack.c.b16 %v391, %v390
    %v477 = vpack.c.b16 %v393, %v392
    %v478 = vpack.c.b16 %v395, %v394
    %v479 = vpack.c.b16 %v397, %v396
    %v480 = vpack.c.b16 %v399, %v398
    %v481 = vpack.c.b16 %v401, %v400
    %v482 = vpack.c.b16 %v403, %v402
    %v483 = vpack.c.b16 %v405, %v404
    %v484 = vpack.c.b16 %v407, %v406
    %v485 = vpack.c.b16 %v409, %v408
    %v486 = vpack.c.b16 %v411, %v410
    %v487 = vpack.c.b16 %v413, %v412
    %v488 = vpack.c.b16 %v415, %v414
    %v489 = vpack.c.b16 %v417, %v416
    %v490 = vpack.c.b16 %v419, %v418
    %v491 = vpack.c.b16 %v421, %v420
    %v492 = vpack.c.b16 %v423, %v422
    %v493 = vpack.c.b16 %v425, %v424
    %v494 = vpack.c.b16 %v427, %v426
    %v495 = vpack.c.b16 %v429, %v428
    %v496 = vpack.c.b16 %v431, %v430
    %v497 = vpack.c.b16 %v433, %v432
    %562 = vmatprep.subr.bf16.mxu0 0
    %563 = vmatpush1.bf16.msra.mxu0 %v441
    %564 = vmatprep.subr.bf16.mxu0 0
    %565 = vmatpush1.bf16.msra.mxu0 %v440
    %566 = vmatprep.subr.bf16.mxu0 0
    %567 = vmatpush1.bf16.msra.mxu0 %v439
    %568 = vmatprep.subr.bf16.mxu0 0
    %569 = vmatpush1.bf16.msra.mxu0 %v438
    %570 = vmatprep.subr.bf16.mxu0 0
    %571 = vmatpush1.bf16.msra.mxu0 %v437
    %572 = vmatprep.subr.bf16.mxu0 0
    %573 = vmatpush1.bf16.msra.mxu0 %v436
    %574 = vmatprep.subr.bf16.mxu0 0
    %575 = vmatpush1.bf16.msra.mxu0 %v435
    %576 = vmatprep.subr.bf16.mxu0 0
    %577 = vmatpush1.bf16.msra.mxu0 %v434
    %578 = vmatprep.subr.bf16.mxu0 0
    %579 = vmatpush2.bf16.msra.mxu0 %v449
    %580 = vmatprep.subr.bf16.mxu0 0
    %581 = vmatpush2.bf16.msra.mxu0 %v448
    %582 = vmatprep.subr.bf16.mxu0 0
    %583 = vmatpush2.bf16.msra.mxu0 %v447
    %584 = vmatprep.subr.bf16.mxu0 0
    %585 = vmatpush2.bf16.msra.mxu0 %v446
    %586 = vmatprep.subr.bf16.mxu0 0
    %587 = vmatpush2.bf16.msra.mxu0 %v445
    %588 = vmatprep.subr.bf16.mxu0 0
    %589 = vmatpush2.bf16.msra.mxu0 %v444
    %590 = vmatprep.subr.bf16.mxu0 0
    %591 = vmatpush2.bf16.msra.mxu0 %v443
    %592 = vmatprep.subr.bf16.mxu0 0
    %593 = vmatpush2.bf16.msra.mxu0 %v442
    %594 = vmatprep.mubr.bf16.mxu0 %v37
    %595 = vmatmul.mubr.bf16.gmra.mxu0 %v36
    %v596 = vpop.f32.mrf.mxu0
    %v597 = vadd.f32 %v176, %v596
    %v598 = vpop.f32.mrf.mxu0
    %v599 = vpop.f32.mrf.mxu0
    %v600 = vpop.f32.mrf.mxu0
    %601 = vdwg.mxu0
    %602 = vmatprep.subr.bf16.mxu0 0
    %603 = vmatpush1.bf16.msra.mxu0 %v457
    %604 = vmatprep.subr.bf16.mxu0 0
    %605 = vmatpush1.bf16.msra.mxu0 %v456
    %606 = vmatprep.subr.bf16.mxu0 0
    %607 = vmatpush1.bf16.msra.mxu0 %v455
    %608 = vmatprep.subr.bf16.mxu0 0
    %609 = vmatpush1.bf16.msra.mxu0 %v454
    %610 = vmatprep.subr.bf16.mxu0 0
    %611 = vmatpush1.bf16.msra.mxu0 %v453
    %612 = vmatprep.subr.bf16.mxu0 0
    %613 = vmatpush1.bf16.msra.mxu0 %v452
    %614 = vmatprep.subr.bf16.mxu0 0
    %615 = vmatpush1.bf16.msra.mxu0 %v451
    %616 = vmatprep.subr.bf16.mxu0 0
    %617 = vmatpush1.bf16.msra.mxu0 %v450
    %618 = vmatprep.subr.bf16.mxu0 0
    %619 = vmatpush2.bf16.msra.mxu0 %v465
    %620 = vmatprep.subr.bf16.mxu0 0
    %621 = vmatpush2.bf16.msra.mxu0 %v464
    %622 = vmatprep.subr.bf16.mxu0 0
    %623 = vmatpush2.bf16.msra.mxu0 %v463
    %624 = vmatprep.subr.bf16.mxu0 0
    %625 = vmatpush2.bf16.msra.mxu0 %v462
    %626 = vmatprep.subr.bf16.mxu0 0
    %627 = vmatpush2.bf16.msra.mxu0 %v461
    %628 = vmatprep.subr.bf16.mxu0 0
    %629 = vmatpush2.bf16.msra.mxu0 %v460
    %630 = vmatprep.subr.bf16.mxu0 0
    %631 = vmatpush2.bf16.msra.mxu0 %v459
    %632 = vmatprep.subr.bf16.mxu0 0
    %633 = vmatpush2.bf16.msra.mxu0 %v458
    %634 = vmatprep.mubr.bf16.mxu0 %v39
    %635 = vmatmul.mubr.bf16.gmra.mxu0 %v38
    %v636 = vpop.f32.mrf.mxu0
    %v637 = vadd.f32 %v597, %v636
    %v638 = vpop.f32.mrf.mxu0
    %v639 = vpop.f32.mrf.mxu0
    %v640 = vpop.f32.mrf.mxu0
    %641 = vdwg.mxu0
    %642 = vmatprep.subr.bf16.mxu0 0
    %643 = vmatpush1.bf16.msra.mxu0 %v473
    %644 = vmatprep.subr.bf16.mxu0 0
    %645 = vmatpush1.bf16.msra.mxu0 %v472
    %646 = vmatprep.subr.bf16.mxu0 0
    %647 = vmatpush1.bf16.msra.mxu0 %v471
    %648 = vmatprep.subr.bf16.mxu0 0
    %649 = vmatpush1.bf16.msra.mxu0 %v470
    %650 = vmatprep.subr.bf16.mxu0 0
    %651 = vmatpush1.bf16.msra.mxu0 %v469
    %652 = vmatprep.subr.bf16.mxu0 0
    %653 = vmatpush1.bf16.msra.mxu0 %v468
    %654 = vmatprep.subr.bf16.mxu0 0
    %655 = vmatpush1.bf16.msra.mxu0 %v467
    %656 = vmatprep.subr.bf16.mxu0 0
    %657 = vmatpush1.bf16.msra.mxu0 %v466
    %658 = vmatprep.subr.bf16.mxu0 0
    %659 = vmatpush2.bf16.msra.mxu0 %v481
    %660 = vmatprep.subr.bf16.mxu0 0
    %661 = vmatpush2.bf16.msra.mxu0 %v480
    %662 = vmatprep.subr.bf16.mxu0 0
    %663 = vmatpush2.bf16.msra.mxu0 %v479
    %664 = vmatprep.subr.bf16.mxu0 0
    %665 = vmatpush2.bf16.msra.mxu0 %v478
    %666 = vmatprep.subr.bf16.mxu0 0
    %667 = vmatpush2.bf16.msra.mxu0 %v477
    %668 = vmatprep.subr.bf16.mxu0 0
    %669 = vmatpush2.bf16.msra.mxu0 %v476
    %670 = vmatprep.subr.bf16.mxu0 0
    %671 = vmatpush2.bf16.msra.mxu0 %v475
    %672 = vmatprep.subr.bf16.mxu0 0
    %673 = vmatpush2.bf16.msra.mxu0 %v474
    %674 = vmatprep.mubr.bf16.mxu0 %v41
    %675 = vmatmul.mubr.bf16.gmra.mxu0 %v40
    %v676 = vpop.f32.mrf.mxu0
    %v677 = vadd.f32 %v637, %v676
    %v678 = vpop.f32.mrf.mxu0
    %v679 = vpop.f32.mrf.mxu0
    %v680 = vpop.f32.mrf.mxu0
    %681 = vdwg.mxu0
    %682 = vmatprep.subr.bf16.mxu0 0
    %683 = vmatpush1.bf16.msra.mxu0 %v489
    %684 = vmatprep.subr.bf16.mxu0 0
    %685 = vmatpush1.bf16.msra.mxu0 %v488
    %686 = vmatprep.subr.bf16.mxu0 0
    %687 = vmatpush1.bf16.msra.mxu0 %v487
    %688 = vmatprep.subr.bf16.mxu0 0
    %689 = vmatpush1.bf16.msra.mxu0 %v486
    %690 = vmatprep.subr.bf16.mxu0 0
    %691 = vmatpush1.bf16.msra.mxu0 %v485
    %692 = vmatprep.subr.bf16.mxu0 0
    %693 = vmatpush1.bf16.msra.mxu0 %v484
    %694 = vmatprep.subr.bf16.mxu0 0
    %695 = vmatpush1.bf16.msra.mxu0 %v483
    %696 = vmatprep.subr.bf16.mxu0 0
    %697 = vmatpush1.bf16.msra.mxu0 %v482
    %698 = vmatprep.subr.bf16.mxu0 0
    %699 = vmatpush2.bf16.msra.mxu0 %v497
    %700 = vmatprep.subr.bf16.mxu0 0
    %701 = vmatpush2.bf16.msra.mxu0 %v496
    %702 = vmatprep.subr.bf16.mxu0 0
    %703 = vmatpush2.bf16.msra.mxu0 %v495
    %704 = vmatprep.subr.bf16.mxu0 0
    %705 = vmatpush2.bf16.msra.mxu0 %v494
    %706 = vmatprep.subr.bf16.mxu0 0
    %707 = vmatpush2.bf16.msra.mxu0 %v493
    %708 = vmatprep.subr.bf16.mxu0 0
    %709 = vmatpush2.bf16.msra.mxu0 %v492
    %710 = vmatprep.subr.bf16.mxu0 0
    %711 = vmatpush2.bf16.msra.mxu0 %v491
    %712 = vmatprep.subr.bf16.mxu0 0
    %713 = vmatpush2.bf16.msra.mxu0 %v490
    %714 = vmatprep.mubr.bf16.mxu0 %v43
    %715 = vmatmul.mubr.bf16.gmra.mxu0 %v42
    %v716 = vpop.f32.mrf.mxu0
    %v717 = vadd.f32 %v677, %v716
    %v718 = vpop.f32.mrf.mxu0
    %v719 = vpop.f32.mrf.mxu0
    %v720 = vpop.f32.mrf.mxu0
    %721 = vdwg.mxu0
    %v722 = vmax.f32 %v717, 0.0
    %v723 = vpack.c.bf16 %v722, %v722
    %v724 = vld [vmem:[%s2] sm:$0xf]
    %v725 = vld [vmem:[%s2 + $0x4] sm:$0xf]
    %v726 = vld [vmem:[%s2 + $0x8] sm:$0xf]
    %v727 = vld [vmem:[%s2 + $0xc] sm:$0xf]
    %v728 = vld [vmem:[%s2 + $0x10] sm:$0xf]
    %v729 = vld [vmem:[%s2 + $0x14] sm:$0xf]
    %v730 = vld [vmem:[%s2 + $0x18] sm:$0xf]
    %v731 = vld [vmem:[%s2 + $0x1c] sm:$0xf]
    %v740 = vunpack.c.l.b16 %v724
    %v741 = vunpack.c.l.b16 %v725
    %v742 = vunpack.c.l.b16 %v726
    %v743 = vunpack.c.l.b16 %v727
    %v744 = vunpack.c.l.b16 %v728
    %v745 = vunpack.c.l.b16 %v729
    %v746 = vunpack.c.l.b16 %v730
    %v747 = vunpack.c.l.b16 %v731
    %v748 = vpack.c.b16 %v741, %v740
    %v749 = vpack.c.b16 %v743, %v742
    %v750 = vpack.c.b16 %v745, %v744
    %v751 = vpack.c.b16 %v747, %v746
    %756 = vrot.lane.b32.xlu0 %v176, 64
    %v757 = vpop.permute.xlu0 %756
    %vm759 = vcmask 523264
    %v761 = vsel %vm759, %v723, 0
    %763 = vmatprep.subr.bf16.mxu0 0
    %764 = vmatpush1.bf16.msra.mxu0 0
    %765 = vmatprep.subr.bf16.mxu0 0
    %766 = vmatpush1.bf16.msra.mxu0 0
    %767 = vmatprep.subr.bf16.mxu0 0
    %768 = vmatpush1.bf16.msra.mxu0 0
    %769 = vmatprep.subr.bf16.mxu0 0
    %770 = vmatpush1.bf16.msra.mxu0 0
    %771 = vmatprep.subr.bf16.mxu0 0
    %772 = vmatpush1.bf16.msra.mxu0 %v751
    %773 = vmatprep.subr.bf16.mxu0 0
    %774 = vmatpush1.bf16.msra.mxu0 %v750
    %775 = vmatprep.subr.bf16.mxu0 0
    %776 = vmatpush1.bf16.msra.mxu0 %v749
    %777 = vmatprep.subr.bf16.mxu0 0
    %778 = vmatpush1.bf16.msra.mxu0 %v748
    %779 = vmatprep.subr.bf16.mxu0 0
    %780 = vmatpush2.bf16.msra.mxu0 0
    %781 = vmatprep.subr.bf16.mxu0 0
    %782 = vmatpush2.bf16.msra.mxu0 0
    %783 = vmatprep.subr.bf16.mxu0 0
    %784 = vmatpush2.bf16.msra.mxu0 0
    %785 = vmatprep.subr.bf16.mxu0 0
    %786 = vmatpush2.bf16.msra.mxu0 0
    %787 = vmatprep.subr.bf16.mxu0 0
    %788 = vmatpush2.bf16.msra.mxu0 0
    %789 = vmatprep.subr.bf16.mxu0 0
    %790 = vmatpush2.bf16.msra.mxu0 0
    %791 = vmatprep.subr.bf16.mxu0 0
    %792 = vmatpush2.bf16.msra.mxu0 0
    %793 = vmatprep.subr.bf16.mxu0 0
    %794 = vmatpush2.bf16.msra.mxu0 0
    %795 = vmatprep.mubr.bf16.mxu0 0
    %796 = vmatmul.mubr.bf16.gmra.mxu0 %v761
    %v797 = vpop.f32.mrf.mxu0
    %v798 = vadd.f32 %v757, %v797
    %v799 = vpop.f32.mrf.mxu0
    %v800 = vpop.f32.mrf.mxu0
    %v801 = vpop.f32.mrf.mxu0
    %802 = vdwg.mxu0
    %vm803 = vcmask 257024
    %804 = vst.msk [vmem:[#allocation2] sm:$0xf] %vm803, %v798
    // Predicated region
    $region18: #{tpu_custom_call.1} parent=1 // pred_check
      _
    $region19: #{tpu_custom_call.1} parent=1 // pred_check_branch
      %806 = sbr.rel (0) target = $region21
    $region20: #{tpu_custom_call.1} parent=1 // pred_region
      %s808 = ssub.s32 64, 64
      %809 = vsyncadd [#allocation3], %s808
      %s811 = sshll.u32 [#allocation2], 4
      %s812 = int_to_ptr.vmem [resolvable:$true] %s811
      %814 = dma.vmem_to_hbm [thread:$0]  %s812, 64, %s4, [#allocation3]
    $region21: #{tpu_custom_call.1} parent=1 // pred_fallthru
      _
    // Predicated region
    $region22: #{tpu_custom_call.1} parent=1 // pred_check
      _
    $region23: #{tpu_custom_call.1} parent=1 // pred_check_branch
      %816 = sbr.rel (0) target = $region25
    $region24: #{tpu_custom_call.1} parent=1 // pred_region
      %817 = dma.done [#allocation3], 64
    $region25: #{tpu_custom_call.1} parent=1 // pred_fallthru
      _
    %818 = vsyncpa [#allocation3], 1

</llo_original>
